<compile_context>
chip_gen: v7x
topology: tpu7x:2x2x1
jax: 0.10.0
libtpu: 0.0.40
codegen_flags: <defaults>
</compile_context>

<pallas_src>
import jax
import jax.numpy as jnp
import numpy as np
from jax.experimental import pallas as pl
from jax.experimental.pallas import tpu as pltpu

HIDDEN = 101            # hidden_size (dummy is hard-coded to 101 in the module)
P_DEGREE = 3
Q_DEGREE = 2
P_COUNT = P_DEGREE + 1
Q_COUNT = Q_DEGREE + 1
N_COEFFS = P_COUNT + Q_COUNT           # 7
NUM_HIDDEN_LAYERS = 3
NEG_SLOPE = 0.01                       # nn.LeakyReLU default

LANE = 512            # lane-dense slab width (multiple of 128)
MAX_TILE_ROWS = 512   # (512, 512) f32 tile = 1 MiB/buffer; 2x(in+out) buffers
                      # = 4 MiB, safely inside v5e (16 MiB scoped), v6e (32 MiB)
                      # and v7x (32 MiB scoped / 64 MiB physical) VMEM.


def _round_up(n, m):
    return -(-n // m) * m


# ---------------------------------------------------------------------------
# Pallas kernel: element-wise rational function over one (tile_rows, LANE)
# block.  coeffs_ref lives in SMEM (scalar prefetch); x/y are pipelined
# HBM<->VMEM tiles.
# ---------------------------------------------------------------------------
def _rational_kernel(coeffs_ref, x_ref, y_ref):
    x = x_ref[...]

    # Horner's rule for numerator / denominator (scalars read from SMEM).
    num = coeffs_ref[0]
    for i in range(1, P_COUNT):
        num = num * x + coeffs_ref[i]
    den = coeffs_ref[P_COUNT]
    for j in range(1, Q_COUNT):
        den = den * x + coeffs_ref[P_COUNT + j]

    # num / den, with the reciprocal on the EUP so it co-issues with the VPU.
    y_ref[...] = num * pl.reciprocal(den, approx=False)


def _rational_apply(coeffs_pad, x):
    """Apply the rational function element-wise to x of any shape."""
    orig_shape = x.shape
    total = x.size
    flat = x.reshape(-1)

    rows_needed = max(1, _round_up(total, LANE) // LANE)
    if rows_needed >= MAX_TILE_ROWS:
        tile_rows = MAX_TILE_ROWS
    else:
        tile_rows = _round_up(rows_needed, 8)          # sublane multiple
    rows = _round_up(rows_needed, tile_rows)           # whole number of tiles

    padded = rows * LANE
    if padded != total:
        flat = jnp.pad(flat, (0, padded - total))      # padding sliced off below
    slab = flat.reshape(rows, LANE)

    grid = (rows // tile_rows,)
    y_slab = pl.pallas_call(
        _rational_kernel,
        out_shape=jax.ShapeDtypeStruct((rows, LANE), jnp.float32),
        grid_spec=pltpu.PrefetchScalarGridSpec(
            num_scalar_prefetch=1,
            grid=grid,
            in_specs=[pl.BlockSpec((tile_rows, LANE), lambda i, c: (i, 0))],
            out_specs=pl.BlockSpec((tile_rows, LANE), lambda i, c: (i, 0)),
        ),
        compiler_params=pltpu.CompilerParams(
            dimension_semantics=("parallel",),
        ),
    )(coeffs_pad, slab)

    return y_slab.reshape(-1)[:total].reshape(orig_shape)


# ---------------------------------------------------------------------------
# Coefficient MLP -- tiny, latency-bound; computed once in plain XLA at
# HIGHEST precision (hoisted out of the Pallas kernel per review).
# ---------------------------------------------------------------------------
def _mlp_coeffs(dummy, ws, bs, wo, bo):
    h = dummy
    for w, b in zip(ws, bs):
        h = jnp.dot(h, w, precision=jax.lax.Precision.HIGHEST) + b
        h = jnp.maximum(h, NEG_SLOPE * h)              # LeakyReLU, 2 VALU ops
    return jnp.dot(h, wo, precision=jax.lax.Precision.HIGHEST) + bo


@jax.jit
def deep_rational_sr_forward(x, dummy, ws, bs, wo, bo):
    coeffs = _mlp_coeffs(dummy, ws, bs, wo, bo)                        # (7,)
    coeffs_pad = jnp.zeros((8,), jnp.float32).at[:N_COEFFS].set(
        coeffs.astype(jnp.float32))                                    # SMEM-friendly
    y = _rational_apply(coeffs_pad, x.astype(jnp.float32))
    return coeffs, y


# ---------------------------------------------------------------------------
# Deterministic parameter construction (mimics nn.Linear uniform init).
# ---------------------------------------------------------------------------
def make_params(key):
    bound = 1.0 / np.sqrt(HIDDEN)
    keys = jax.random.split(key, 2 * (NUM_HIDDEN_LAYERS + 1))
    ws, bs = [], []
    for l in range(NUM_HIDDEN_LAYERS):
        ws.append(jax.random.uniform(keys[2 * l], (HIDDEN, HIDDEN),
                                     jnp.float32, -bound, bound))
        bs.append(jax.random.uniform(keys[2 * l + 1], (HIDDEN,),
                                     jnp.float32, -bound, bound))
    wo = jax.random.uniform(keys[-2], (HIDDEN, N_COEFFS), jnp.float32, -bound, bound)
    bo = jax.random.uniform(keys[-1], (N_COEFFS,), jnp.float32, -bound, bound)
    return tuple(ws), tuple(bs), wo, bo


def _check(x, coeffs, y):
    cn = np.asarray(coeffs, dtype=np.float64)
    xn = np.asarray(x, dtype=np.float64)
    num_ref = sum(cn[i] * xn ** (P_COUNT - 1 - i) for i in range(P_COUNT))
    den_ref = sum(cn[P_COUNT + j] * xn ** (Q_COUNT - 1 - j) for j in range(Q_COUNT))
    # TODO(synk): like the PyTorch reference, no guard on near-zero denominators
    # (num/den may be inf/NaN there); exclude those points from the comparison.
    mask = np.abs(den_ref) > 0.05
    np.testing.assert_allclose(np.asarray(y)[mask], (num_ref / den_ref)[mask],
                               rtol=1e-3, atol=1e-3)
    assert y.shape == x.shape and y.dtype == jnp.float32


if __name__ == "__main__":
    key = jax.random.PRNGKey(0)
    k_dummy, k_x, k_x2, k_params = jax.random.split(key, 4)

    # "torch.randn(101)" dummy -- the module re-samples it every forward; we
    # fix it deterministically here.
    dummy = jax.random.normal(k_dummy, (HIDDEN,), jnp.float32)
    ws, bs, wo, bo = make_params(k_params)

    # Small NCHW input, element-wise rational function of it.
    x = jax.random.normal(k_x, (2, 4, 16, 16), jnp.float32)
    coeffs, y = deep_rational_sr_forward(x, dummy, ws, bs, wo, bo)
    jax.block_until_ready(y)
    _check(x, coeffs, y)

    # Second run exercising the multi-tile (grid > 1) pipelined path.
    x2 = jax.random.normal(k_x2, (4, 4, 256, 256), jnp.float32)
    coeffs2, y2 = deep_rational_sr_forward(x2, dummy, ws, bs, wo, bo)
    jax.block_until_ready(y2)
    _check(x2, coeffs2, y2)

    print("KERNEL_OK")
</pallas_src>

<mosaic_0001>
module attributes {stable_mosaic.version = 11 : i64} {
  func.func @_rational_kernel(%arg0: i32, %arg1: memref<8xf32, #tpu.memory_space<smem>>, %arg2: memref<8x512xf32, #tpu.memory_space<vmem>>, %arg3: memref<8x512xf32, #tpu.memory_space<vmem>>) attributes {dimension_semantics = [#tpu.dimension_semantics<parallel>], iteration_bounds = array<i64: 1>, scalar_prefetch = 1 : i64, scratch_operands = 0 : i64, tpu.core_type = #tpu.core_type<tc>, window_params = [{transform_indices = @transform_0, window_bounds = array<i64: 8, 512>}, {transform_indices = @transform_1, window_bounds = array<i64: 8, 512>}]} {
    %c0 = arith.constant 0 : index
    %c0_0 = arith.constant 0 : index
    %0 = vector.load %arg2[%c0, %c0_0] : memref<8x512xf32, #tpu.memory_space<vmem>>, vector<8x512xf32>
    %c0_1 = arith.constant 0 : index
    %1 = memref.load %arg1[%c0_1] : memref<8xf32, #tpu.memory_space<smem>>
    %2 = vector.broadcast %1 : f32 to vector<8x512xf32>
    %3 = arith.mulf %2, %0 : vector<8x512xf32>
    %c1 = arith.constant 1 : index
    %4 = memref.load %arg1[%c1] : memref<8xf32, #tpu.memory_space<smem>>
    %5 = vector.broadcast %4 : f32 to vector<8x512xf32>
    %6 = arith.addf %3, %5 : vector<8x512xf32>
    %7 = arith.mulf %6, %0 : vector<8x512xf32>
    %c2 = arith.constant 2 : index
    %8 = memref.load %arg1[%c2] : memref<8xf32, #tpu.memory_space<smem>>
    %9 = vector.broadcast %8 : f32 to vector<8x512xf32>
    %10 = arith.addf %7, %9 : vector<8x512xf32>
    %11 = arith.mulf %10, %0 : vector<8x512xf32>
    %c3 = arith.constant 3 : index
    %12 = memref.load %arg1[%c3] : memref<8xf32, #tpu.memory_space<smem>>
    %13 = vector.broadcast %12 : f32 to vector<8x512xf32>
    %14 = arith.addf %11, %13 : vector<8x512xf32>
    %c4 = arith.constant 4 : index
    %15 = memref.load %arg1[%c4] : memref<8xf32, #tpu.memory_space<smem>>
    %16 = vector.broadcast %15 : f32 to vector<8x512xf32>
    %17 = arith.mulf %16, %0 : vector<8x512xf32>
    %c5 = arith.constant 5 : index
    %18 = memref.load %arg1[%c5] : memref<8xf32, #tpu.memory_space<smem>>
    %19 = vector.broadcast %18 : f32 to vector<8x512xf32>
    %20 = arith.addf %17, %19 : vector<8x512xf32>
    %21 = arith.mulf %20, %0 : vector<8x512xf32>
    %c6 = arith.constant 6 : index
    %22 = memref.load %arg1[%c6] : memref<8xf32, #tpu.memory_space<smem>>
    %23 = vector.broadcast %22 : f32 to vector<8x512xf32>
    %24 = arith.addf %21, %23 : vector<8x512xf32>
    %25 = tpu.reciprocal %24 : vector<8x512xf32> -> vector<8x512xf32>
    %26 = arith.mulf %14, %25 : vector<8x512xf32>
    %c0_2 = arith.constant 0 : index
    %c0_3 = arith.constant 0 : index
    %27 = vector.load %arg3[%c0_2, %c0_3] : memref<8x512xf32, #tpu.memory_space<vmem>>, vector<8x512xf32>
    tpu.vector_store %arg3[%c0_2, %c0_3], %26 {strides = array<i32>} : memref<8x512xf32, #tpu.memory_space<vmem>>, vector<8x512xf32>,
    return
  }
  func.func @transform_0(%arg0: i32, %arg1: memref<8xf32, #tpu.memory_space<smem>>) -> (i32, i32) {
    %c0_i32 = arith.constant 0 : i32
    %c0_i32_0 = arith.constant 0 : i32
    return %arg0, %c0_i32 : i32, i32
  }
  func.func @transform_1(%arg0: i32, %arg1: memref<8xf32, #tpu.memory_space<smem>>) -> (i32, i32) {
    %c0_i32 = arith.constant 0 : i32
    %c0_i32_0 = arith.constant 0 : i32
    return %arg0, %c0_i32 : i32, i32
  }
}

</mosaic_0001>

<llo_original>
// kernel: deep_rational_sr_forward.1
$region0: #{deep_rational_sr_forward.1}
  #allocation0 [shape = 'u32[]', space=smem, size = 0x4, offset = 0x4, fixed_abs, tag = 'smem constant byte address 0x4 - core index']
  #allocation1 [shape = 'u32[144,128]{1,0:T(1,128)}', space=vmem, size = 0x12000, scoped, tag = 'internal scratch']
  #allocation2 [shape = 's32[1]{0}', space=sflag, size = 0x4, scoped, tag = 'scoped memory for deep_rational_sr_forward.1']
  #allocation3 [shape = 'u8[512]{0}', space=smem, size = 0x200, scoped, tag = 'prefetched SMEM operand 0']
  %s0 = inlined_call_operand.vmem [shape: f32[8], index: 0, kind: input, shape index: {}]
  %s1 = inlined_call_operand.vmem [shape: f32[8,512], index: 1, kind: input, shape index: {}]
  %s2 = inlined_call_operand.vmem [shape: f32[8,512], index: 2, kind: output, shape index: {}]
  %s3 = sld [smem:[#allocation0]]
  $region14: #{deep_rational_sr_forward.1} parent=0
    _
  %s5 = ssub.s32 1, %s3
  %s6 = scalar_select 0, %s5, %s3
  %s7 = sshll.u32 %s0, 4
  %s8 = int_to_ptr.vmem [resolvable:$true] %s7
  %10 = dma.vmem_to_smem %s8, 16, [#allocation3], [#allocation2]
  %11 = dma.done [#allocation2], 16
  %12 = sfence
  // Predicated region
  $region2: #{deep_rational_sr_forward.1} parent=0 // pred_check
    _
  $region3: #{deep_rational_sr_forward.1} parent=0 // pred_check_branch
    %14 = sbr.rel (0) target = $region5
  $region4: #{deep_rational_sr_forward.1} parent=0 // pred_region
    _
  $region5: #{deep_rational_sr_forward.1} parent=0 // pred_fallthru
    _
  %v15 = vld [vmem:[%s1] sm:$0xff]
  %v16 = vld [vmem:[%s1 + $0x8] sm:$0xff]
  %v17 = vld [vmem:[%s1 + $0x10] sm:$0xff]
  %v18 = vld [vmem:[%s1 + $0x18] sm:$0xff]
  %s19 = sld [smem:[#allocation3]]
  %v20 = vstv %s19
  %v21 = vmul.f32 %v20, %v15
  %v22 = vmul.f32 %v20, %v16
  %v23 = vmul.f32 %v20, %v17
  %v24 = vmul.f32 %v20, %v18
  %s25 = sld [smem:[#allocation3 + $0x1]]
  %v26 = vstv %s25
  %v27 = vadd.f32 %v21, %v26
  %v28 = vadd.f32 %v22, %v26
  %v29 = vadd.f32 %v23, %v26
  %v30 = vadd.f32 %v24, %v26
  %v31 = vmul.f32 %v27, %v15
  %v32 = vmul.f32 %v28, %v16
  %v33 = vmul.f32 %v29, %v17
  %v34 = vmul.f32 %v30, %v18
  %s35 = sld [smem:[#allocation3 + $0x2]]
  %v36 = vstv %s35
  %v37 = vadd.f32 %v31, %v36
  %v38 = vadd.f32 %v32, %v36
  %v39 = vadd.f32 %v33, %v36
  %v40 = vadd.f32 %v34, %v36
  %v41 = vmul.f32 %v37, %v15
  %v42 = vmul.f32 %v38, %v16
  %v43 = vmul.f32 %v39, %v17
  %v44 = vmul.f32 %v40, %v18
  %s45 = sld [smem:[#allocation3 + $0x3]]
  %v46 = vstv %s45
  %v47 = vadd.f32 %v41, %v46
  %v48 = vadd.f32 %v42, %v46
  %v49 = vadd.f32 %v43, %v46
  %v50 = vadd.f32 %v44, %v46
  %s51 = sld [smem:[#allocation3 + $0x4]]
  %v52 = vstv %s51
  %v53 = vmul.f32 %v52, %v15
  %v54 = vmul.f32 %v52, %v16
  %v55 = vmul.f32 %v52, %v17
  %v56 = vmul.f32 %v52, %v18
  %s57 = sld [smem:[#allocation3 + $0x5]]
  %v58 = vstv %s57
  %v59 = vadd.f32 %v53, %v58
  %v60 = vadd.f32 %v54, %v58
  %v61 = vadd.f32 %v55, %v58
  %v62 = vadd.f32 %v56, %v58
  %v63 = vmul.f32 %v59, %v15
  %v64 = vmul.f32 %v60, %v16
  %v65 = vmul.f32 %v61, %v17
  %v66 = vmul.f32 %v62, %v18
  %s67 = sld [smem:[#allocation3 + $0x6]]
  %v68 = vstv %s67
  %v69 = vadd.f32 %v63, %v68
  %v70 = vadd.f32 %v64, %v68
  %v71 = vadd.f32 %v65, %v68
  %v72 = vadd.f32 %v66, %v68
  %v73 = vrcp.pop %v69
  %v74 = vrcp.pop %v70
  %v75 = vrcp.pop %v71
  %v76 = vrcp.pop %v72
  %v77 = vmul.f32 %v47, %v73
  %v78 = vmul.f32 %v48, %v74
  %v79 = vmul.f32 %v49, %v75
  %v80 = vmul.f32 %v50, %v76
  %81 = vst [vmem:[%s2] sm:$0xff] %v77
  %82 = vst [vmem:[%s2 + $0x8] sm:$0xff] %v78
  %83 = vst [vmem:[%s2 + $0x10] sm:$0xff] %v79
  %84 = vst [vmem:[%s2 + $0x18] sm:$0xff] %v80
  // Predicated region
  $region6: #{deep_rational_sr_forward.1} parent=0 // pred_check
    _
  $region7: #{deep_rational_sr_forward.1} parent=0 // pred_check_branch
    %86 = sbr.rel (0) target = $region9
  $region8: #{deep_rational_sr_forward.1} parent=0 // pred_region
    _
  $region9: #{deep_rational_sr_forward.1} parent=0 // pred_fallthru
    _
  // Predicated region
  $region10: #{deep_rational_sr_forward.1} parent=0 // pred_check
    _
  $region11: #{deep_rational_sr_forward.1} parent=0 // pred_check_branch
    %88 = sbr.rel (0) target = $region13
  $region12: #{deep_rational_sr_forward.1} parent=0 // pred_region
    _
  $region13: #{deep_rational_sr_forward.1} parent=0 // pred_fallthru
    _

</llo_original>
